<compile_context>
chip_gen: v6e
topology: v6e:2x2x1
jax: 0.10.0
libtpu: 0.0.40
codegen_flags: <defaults>
</compile_context>

<pallas_src>
import functools

import jax
import jax.numpy as jnp
from jax.experimental import pallas as pl
from jax.experimental.pallas import tpu as pltpu


def _round_up(a, b):
    return (a + b - 1) // b * b


def _tv_loss_kernel(x_ref, vh_ref, vv_ref, out_ref, *, H, W):
    # x_ref:  (P, HWp) block of flattened image planes (P % 8 == 0,
    #         HWp % 128 == 0).
    # vh_ref/vv_ref: (1, HWp) f32 pair-validity masks, keyed by the *lower*
    #         flat index of the (horizontal / vertical) neighbour pair.
    # out_ref: (1, 8, 128) per-block partial sums (lane-dense output).
    P, HWp = x_ref.shape
    x = x_ref[...].astype(jnp.float32)  # ship native dtype over HBM, acc in f32
    lane = jax.lax.broadcasted_iota(jnp.int32, (1, HWp), 1)

    def masked_absdiff(valid_lo_row, delta):
        # Rotate so each position k sees its flat-index (k +/- delta) partner.
        # The mask below is derived from the rolled iota, so it is correct for
        # either rotate direction convention.
        shift = (HWp - delta) % HWp
        nbr = pltpu.roll(lane, shift, axis=1)              # partner's index
        d = nbr - lane
        valid_nbr = pltpu.roll(valid_lo_row, shift, axis=1)  # valid_lo[nbr[k]]
        pair_ok = jnp.where(d == delta, valid_lo_row,
                            jnp.where(d == -delta, valid_nbr, 0.0))  # (1, HWp)
        partner = pltpu.roll(x, shift, axis=1)             # (P, HWp)
        return jnp.abs(x - partner) * pair_ok              # broadcast over rows

    terms = []
    if W > 1:
        terms.append(masked_absdiff(vh_ref[...], 1))       # horizontal pairs
    if H > 1:
        terms.append(masked_absdiff(vv_ref[...], W))       # vertical pairs

    if terms:
        total = terms[0]
        for t in terms[1:]:
            total = total + t
    else:
        total = jnp.zeros_like(x)

    # Fold the (P, HWp) block down to a lane-dense (8, 128) partial using only
    # aligned static slices (pure VPU adds, no relayout, no cross-step chain).
    acc = total[0:8, :]
    for i in range(1, P // 8):
        acc = acc + total[i * 8:(i + 1) * 8, :]
    part = acc[:, 0:128]
    for j in range(1, HWp // 128):
        part = part + acc[:, j * 128:(j + 1) * 128]
    out_ref[0] = part


def tv_loss_forward(x, weight, *, block_bytes=2 * 1024 * 1024):
    """Mirrors TVLoss.forward: returns (input, loss)."""
    N, C, H, W = x.shape
    nc, hw = N * C, H * W

    # Lane-dense flat layout; pad lanes to a multiple of 128.  Avoid the
    # degenerate rotate-by-half-width case (HWp == 2*W) so every neighbour
    # pair is counted exactly once.
    hwp = _round_up(hw, 128)
    if hwp == 2 * W:
        hwp += 128

    # Rows (planes) per block: multiple of 8, sized well inside the scoped
    # VMEM budget with double-buffering on all generations (incl. v7x 64 MiB).
    bytes_per_row = hwp * jnp.dtype(x.dtype).itemsize
    rows_budget = max(8, (block_bytes // bytes_per_row) // 8 * 8)
    P = int(min(512, rows_budget, _round_up(nc, 8)))
    nc_pad = _round_up(nc, P)
    num_blocks = nc_pad // P

    x2 = x.reshape(nc, hw)
    if nc_pad != nc or hwp != hw:
        x2 = jnp.pad(x2, ((0, nc_pad - nc), (0, hwp - hw)))

    # Pair-validity masks keyed by the lower flat index of the pair,
    # precomputed here so the kernel does no integer div/mod per element.
    m = jnp.arange(hwp, dtype=jnp.int32)
    valid_h = jnp.logical_and(m % W != W - 1, m < hw - 1).astype(jnp.float32)
    valid_v = (m < (H - 1) * W).astype(jnp.float32)
    valid_h = valid_h.reshape(1, hwp)
    valid_v = valid_v.reshape(1, hwp)

    partials = pl.pallas_call(
        functools.partial(_tv_loss_kernel, H=H, W=W),
        out_shape=jax.ShapeDtypeStruct((num_blocks, 8, 128), jnp.float32),
        grid=(num_blocks,),
        in_specs=[
            pl.BlockSpec((P, hwp), lambda i: (i, 0)),
            pl.BlockSpec((1, hwp), lambda i: (0, 0)),
            pl.BlockSpec((1, hwp), lambda i: (0, 0)),
        ],
        out_specs=pl.BlockSpec((1, 8, 128), lambda i: (i, 0, 0)),
        compiler_params=pltpu.CompilerParams(
            dimension_semantics=("parallel",),
            vmem_limit_bytes=32 * 1024 * 1024,
        ),
        cost_estimate=pl.CostEstimate(
            flops=8 * nc_pad * hwp,
            transcendentals=0,
            bytes_accessed=int(nc_pad * hwp * x2.dtype.itemsize
                               + num_blocks * 8 * 128 * 4),
        ),
    )(x2, valid_h, valid_v)

    # Single tiny final reduce + weight scaling in plain JAX.
    loss = jnp.sum(partials) * jnp.float32(weight)
    # The PyTorch module returns the input tensor unchanged.
    return x, loss


if __name__ == "__main__":
    key = jax.random.PRNGKey(0)
    N, C, H, W = 2, 4, 16, 16
    x = jax.random.normal(key, (N, C, H, W), dtype=jnp.float32)

    # Deterministic "parameter" from __init__(weight).
    weight = 2.0

    out, loss = tv_loss_forward(x, weight)
    out = jax.block_until_ready(out)
    loss = jax.block_until_ready(loss)

    # Pure-JAX reference for correctness.
    x_diff = x[:, :, 1:, :] - x[:, :, :-1, :]
    y_diff = x[:, :, :, 1:] - x[:, :, :, :-1]
    ref_loss = (jnp.sum(jnp.abs(x_diff)) + jnp.sum(jnp.abs(y_diff))) * weight

    assert out.shape == x.shape and bool(jnp.all(out == x)), "pass-through mismatch"
    assert jnp.allclose(loss, ref_loss, rtol=1e-5, atol=1e-3), (
        f"loss mismatch: {loss} vs {ref_loss}"
    )
    print("KERNEL_OK")
</pallas_src>

<mosaic_0001>
module attributes {stable_mosaic.version = 11 : i64} {
  func.func @_tv_loss_kernel(%arg0: i32, %arg1: memref<8x256xf32, #tpu.memory_space<vmem>>, %arg2: memref<1x256xf32, #tpu.memory_space<vmem>>, %arg3: memref<1x256xf32, #tpu.memory_space<vmem>>, %arg4: memref<1x8x128xf32, #tpu.memory_space<vmem>>) attributes {dimension_semantics = [#tpu.dimension_semantics<parallel>], iteration_bounds = array<i64: 1>, scalar_prefetch = 0 : i64, scratch_operands = 0 : i64, tpu.core_type = #tpu.core_type<tc>, window_params = [{transform_indices = @transform_0, window_bounds = array<i64: 8, 256>}, {pipeline_mode = #tpu.pipeline_mode<synchronous>, transform_indices = @transform_1, window_bounds = array<i64: 1, 256>}, {pipeline_mode = #tpu.pipeline_mode<synchronous>, transform_indices = @transform_2, window_bounds = array<i64: 1, 256>}, {transform_indices = @transform_3, window_bounds = array<i64: 1, 8, 128>}]} {
    %c0 = arith.constant 0 : index
    %c0_0 = arith.constant 0 : index
    %0 = vector.load %arg1[%c0, %c0_0] : memref<8x256xf32, #tpu.memory_space<vmem>>, vector<8x256xf32>
    %1 = tpu.iota {dimensions = array<i32: 1>} : vector<1x256xi32>
    %c0_1 = arith.constant 0 : index
    %c0_2 = arith.constant 0 : index
    %2 = vector.load %arg2[%c0_1, %c0_2] : memref<1x256xf32, #tpu.memory_space<vmem>>, vector<1x256xf32>
    %c255_i32 = arith.constant 255 : i32
    %3 = tpu.dynamic_rotate %1 by %c255_i32 dim 1 : vector<1x256xi32>, i32 -> vector<1x256xi32>
    %4 = arith.subi %3, %1 : vector<1x256xi32>
    %c255_i32_3 = arith.constant 255 : i32
    %5 = tpu.dynamic_rotate %2 by %c255_i32_3 dim 1 : vector<1x256xf32>, i32 -> vector<1x256xf32>
    %c1_i32 = arith.constant 1 : i32
    %6 = vector.broadcast %c1_i32 : i32 to vector<1x256xi32>
    %7 = arith.cmpi eq, %4, %6 : vector<1x256xi32>
    %c-1_i32 = arith.constant -1 : i32
    %8 = vector.broadcast %c-1_i32 : i32 to vector<1x256xi32>
    %9 = arith.cmpi eq, %4, %8 : vector<1x256xi32>
    %cst = arith.constant 0.000000e+00 : f32
    %10 = vector.broadcast %cst : f32 to vector<1x256xf32>
    %11 = arith.select %9, %5, %10 : vector<1x256xi1>, vector<1x256xf32>
    %12 = arith.select %7, %2, %11 : vector<1x256xi1>, vector<1x256xf32>
    %c255_i32_4 = arith.constant 255 : i32
    %13 = tpu.dynamic_rotate %0 by %c255_i32_4 dim 1 : vector<8x256xf32>, i32 -> vector<8x256xf32>
    %14 = arith.subf %0, %13 : vector<8x256xf32>
    %15 = math.absf %14 : vector<8x256xf32>
    %16 = vector.broadcast %12 : vector<1x256xf32> to vector<8x256xf32>
    %17 = arith.mulf %15, %16 : vector<8x256xf32>
    %c0_5 = arith.constant 0 : index
    %c0_6 = arith.constant 0 : index
    %18 = vector.load %arg3[%c0_5, %c0_6] : memref<1x256xf32, #tpu.memory_space<vmem>>, vector<1x256xf32>
    %c240_i32 = arith.constant 240 : i32
    %19 = tpu.dynamic_rotate %1 by %c240_i32 dim 1 : vector<1x256xi32>, i32 -> vector<1x256xi32>
    %20 = arith.subi %19, %1 : vector<1x256xi32>
    %c240_i32_7 = arith.constant 240 : i32
    %21 = tpu.dynamic_rotate %18 by %c240_i32_7 dim 1 : vector<1x256xf32>, i32 -> vector<1x256xf32>
    %c16_i32 = arith.constant 16 : i32
    %22 = vector.broadcast %c16_i32 : i32 to vector<1x256xi32>
    %23 = arith.cmpi eq, %20, %22 : vector<1x256xi32>
    %c-16_i32 = arith.constant -16 : i32
    %24 = vector.broadcast %c-16_i32 : i32 to vector<1x256xi32>
    %25 = arith.cmpi eq, %20, %24 : vector<1x256xi32>
    %cst_8 = arith.constant 0.000000e+00 : f32
    %26 = vector.broadcast %cst_8 : f32 to vector<1x256xf32>
    %27 = arith.select %25, %21, %26 : vector<1x256xi1>, vector<1x256xf32>
    %28 = arith.select %23, %18, %27 : vector<1x256xi1>, vector<1x256xf32>
    %c240_i32_9 = arith.constant 240 : i32
    %29 = tpu.dynamic_rotate %0 by %c240_i32_9 dim 1 : vector<8x256xf32>, i32 -> vector<8x256xf32>
    %30 = arith.subf %0, %29 : vector<8x256xf32>
    %31 = math.absf %30 : vector<8x256xf32>
    %32 = vector.broadcast %28 : vector<1x256xf32> to vector<8x256xf32>
    %33 = arith.mulf %31, %32 : vector<8x256xf32>
    %34 = arith.addf %17, %33 : vector<8x256xf32>
    %35 = vector.extract_strided_slice %34 {offsets = [0, 0], sizes = [8, 128], strides = [1, 1]} : vector<8x256xf32> to vector<8x128xf32>
    %36 = vector.extract_strided_slice %34 {offsets = [0, 128], sizes = [8, 128], strides = [1, 1]} : vector<8x256xf32> to vector<8x128xf32>
    %37 = arith.addf %35, %36 : vector<8x128xf32>
    %c0_10 = arith.constant 0 : index
    %c0_11 = arith.constant 0 : index
    %c0_12 = arith.constant 0 : index
    %38 = vector.load %arg4[%c0_10, %c0_11, %c0_12] : memref<1x8x128xf32, #tpu.memory_space<vmem>>, vector<1x8x128xf32>
    %39 = vector.shape_cast %38 : vector<1x8x128xf32> to vector<8x128xf32>
    %40 = vector.shape_cast %37 : vector<8x128xf32> to vector<1x8x128xf32>
    tpu.vector_store %arg4[%c0_10, %c0_11, %c0_12], %40 {strides = array<i32>} : memref<1x8x128xf32, #tpu.memory_space<vmem>>, vector<1x8x128xf32>,
    return
  }
  func.func @transform_0(%arg0: i32) -> (i32, i32) {
    %c0_i32 = arith.constant 0 : i32
    %c0_i32_0 = arith.constant 0 : i32
    return %arg0, %c0_i32 : i32, i32
  }
  func.func @transform_1(%arg0: i32) -> (i32, i32) {
    %c0_i32 = arith.constant 0 : i32
    %c0_i32_0 = arith.constant 0 : i32
    %c0_i32_1 = arith.constant 0 : i32
    return %c0_i32, %c0_i32_0 : i32, i32
  }
  func.func @transform_2(%arg0: i32) -> (i32, i32) {
    %c0_i32 = arith.constant 0 : i32
    %c0_i32_0 = arith.constant 0 : i32
    %c0_i32_1 = arith.constant 0 : i32
    return %c0_i32, %c0_i32_0 : i32, i32
  }
  func.func @transform_3(%arg0: i32) -> (i32, i32, i32) {
    %c0_i32 = arith.constant 0 : i32
    %c0_i32_0 = arith.constant 0 : i32
    %c0_i32_1 = arith.constant 0 : i32
    return %arg0, %c0_i32, %c0_i32_0 : i32, i32, i32
  }
}

</mosaic_0001>

<llo_original>
// kernel: tpu_custom_call.1
$region0: #{tpu_custom_call.1}
  #allocation0 [shape = 'u32[]', space=smem, size = 0x4, offset = 0x4, fixed_abs, tag = 'smem constant byte address 0x4 - core index']
  #allocation1 [shape = 'u32[144,128]{1,0:T(1,128)}', space=vmem, size = 0x12000, scoped, tag = 'internal scratch']
  %s0 = inlined_call_operand.hbm [shape: f32[8,256], index: 0, kind: input, shape index: {}]
  %s1 = inlined_call_operand.hbm [shape: f32[1,256], index: 1, kind: input, shape index: {}]
  %s2 = inlined_call_operand.vmem [shape: f32[1,256], index: 2, kind: input, shape index: {}]
  %s3 = inlined_call_operand.hbm [shape: f32[1,8,128], index: 3, kind: output, shape index: {}]
  %s4 = sld [smem:[#allocation0]]
  $region30: #{tpu_custom_call.1} parent=0
    _
  %s6 = ssub.s32 1, %s4
  %s7 = scalar_select 0, %s6, %s4
  $region1: #{tpu_custom_call.1} parent=0
    #allocation2 [shape = 'u8[8192]{0}', space=vmem, size = 0x2000, scoped, tag = 'input window, operand 0, single buffered']
    #allocation3 [shape = 's32[1]{0}', space=sflag, size = 0x4, scoped, tag = 'scoped memory for tpu_custom_call.1']
    #allocation4 [shape = 's32[1]{0}', space=sflag, size = 0x4, scoped, tag = 'scoped memory for tpu_custom_call.1']
    #allocation5 [shape = 'u8[1024]{0}', space=vmem, size = 0x400, scoped, tag = 'input window, operand 1, single buffered']
    #allocation6 [shape = 's32[1]{0}', space=sflag, size = 0x4, scoped, tag = 'scoped memory for tpu_custom_call.1']
    #allocation7 [shape = 'u8[4096]{0}', space=vmem, size = 0x1000, scoped, tag = 'output window, operand 0, single buffered']
    %8 = vsyncpa [#allocation3], 0
    %9 = vsyncpa [#allocation6], 0
    %10 = vsyncpa [#allocation4], 0
    // Predicated region
    $region2: #{tpu_custom_call.1} parent=1 // pred_check
      _
    $region3: #{tpu_custom_call.1} parent=1 // pred_check_branch
      %12 = sbr.rel (0) target = $region5
    $region4: #{tpu_custom_call.1} parent=1 // pred_region
      %s14 = ssub.s32 256, 256
      %15 = vsyncadd [#allocation3], %s14
      %s17 = sshll.u32 [#allocation2], 4
      %s18 = int_to_ptr.vmem [resolvable:$true] %s17
      %20 = dma.hbm_to_vmem [thread:$0]  %s0, 256, %s18, [#allocation3]
    $region5: #{tpu_custom_call.1} parent=1 // pred_fallthru
      _
    // Predicated region
    $region6: #{tpu_custom_call.1} parent=1 // pred_check
      _
    $region7: #{tpu_custom_call.1} parent=1 // pred_check_branch
      %22 = sbr.rel (0) target = $region9
    $region8: #{tpu_custom_call.1} parent=1 // pred_region
      %s24 = ssub.s32 32, 32
      %25 = vsyncadd [#allocation6], %s24
      %s27 = sshll.u32 [#allocation5], 4
      %s28 = int_to_ptr.vmem [resolvable:$true] %s27
      %30 = dma.hbm_to_vmem [thread:$0]  %s1, 32, %s28, [#allocation6]
    $region9: #{tpu_custom_call.1} parent=1 // pred_fallthru
      _
    // Predicated region
    $region10: #{tpu_custom_call.1} parent=1 // pred_check
      _
    $region11: #{tpu_custom_call.1} parent=1 // pred_check_branch
      %32 = sbr.rel (0) target = $region13
    $region12: #{tpu_custom_call.1} parent=1 // pred_region
      _
    $region13: #{tpu_custom_call.1} parent=1 // pred_fallthru
      _
    // Predicated region
    $region14: #{tpu_custom_call.1} parent=1 // pred_check
      _
    $region15: #{tpu_custom_call.1} parent=1 // pred_check_branch
      %34 = sbr.rel (0) target = $region17
    $region16: #{tpu_custom_call.1} parent=1 // pred_region
      %35 = dma.done [#allocation3], 256
    $region17: #{tpu_custom_call.1} parent=1 // pred_fallthru
      _
    // Predicated region
    $region18: #{tpu_custom_call.1} parent=1 // pred_check
      _
    $region19: #{tpu_custom_call.1} parent=1 // pred_check_branch
      %37 = sbr.rel (0) target = $region21
    $region20: #{tpu_custom_call.1} parent=1 // pred_region
      %38 = dma.done [#allocation6], 32
    $region21: #{tpu_custom_call.1} parent=1 // pred_fallthru
      _
    %v39 = vld [vmem:[#allocation2] sm:$0xff]
    %v40 = vld [vmem:[#allocation2 + $0x8] sm:$0xff]
    %v41 = vlaneseq
    %v42 = vand.u32 %v41, 127
    %v43 = vadd.s32 %v42, 128
    %v44 = vld [vmem:[#allocation5] sm:$0x3]
    %45 = vrot.lane.b32.xlu0 %v42, 127
    %v46 = vpop.permute.xlu0 %45
    %47 = vrot.lane.b32.xlu0 %v43, 127
    %v48 = vpop.permute.xlu0 %47
    %vm49 = vcmp.lt.s32.totalorder %v42, 127
    %v50 = vsel %vm49, %v46, %v48
    %v51 = vsel %vm49, %v48, %v46
    %v52 = vsub.s32 %v50, %v42
    %v53 = vsub.s32 %v51, %v43
    %v55 = vlaneseq
    %v56 = vshrl.u32 %v55, 7
    %v57 = vsub.s32 0, %v56
    %v58 = vrot.slane %v44, %v57
    %v59 = vlaneseq
    %v60 = vshrl.u32 %v59, 7
    %v61 = vsub.s32 1, %v60
    %v62 = vrot.slane %v44, %v61
    %65 = vrot.lane.b32.xlu0 %v58, 127
    %v66 = vpop.permute.xlu0 %65
    %67 = vrot.lane.b32.xlu0 %v62, 127
    %v68 = vpop.permute.xlu0 %67
    %v69 = vsel %vm49, %v66, %v68
    %v70 = vsel %vm49, %v68, %v66
    %vm71 = vcmp.eq.s32.totalorder %v52, 1
    %vm72 = vcmp.eq.s32.totalorder %v53, 1
    %vm73 = vcmp.eq.s32.totalorder %v52, 4294967295
    %vm74 = vcmp.eq.s32.totalorder %v53, 4294967295
    %v75 = vsel %vm73, %v69, 0.0
    %v76 = vsel %vm74, %v70, 0.0
    %v77 = vsel %vm71, %v58, %v75
    %v78 = vsel %vm72, %v62, %v76
    %79 = vrot.lane.b32.xlu0 %v39, 127
    %v80 = vpop.permute.xlu0 %79
    %81 = vrot.lane.b32.xlu0 %v40, 127
    %v82 = vpop.permute.xlu0 %81
    %v83 = vsel %vm49, %v80, %v82
    %v84 = vsel %vm49, %v82, %v80
    %v85 = vsub.f32 %v39, %v83
    %v86 = vsub.f32 %v40, %v84
    %v87 = vand.u32 2147483647, %v85
    %v88 = vand.u32 2147483647, %v86
    %v89 = vlaneseq
    %v90 = vshrl.u32 %v89, 7
    %v91 = vsub.s32 0, %v90
    %v92 = vrot.slane %v77, %v91
    %v93 = vlaneseq
    %v94 = vshrl.u32 %v93, 7
    %v95 = vsub.s32 0, %v94
    %v96 = vrot.slane %v78, %v95
    %v97 = vmul.f32 %v87, %v92
    %v98 = vmul.f32 %v88, %v96
    %v99 = vld [vmem:[%s2] sm:$0x3]
    %100 = vrot.lane.b32.xlu0 %v42, 112
    %v101 = vpop.permute.xlu0 %100
    %102 = vrot.lane.b32.xlu0 %v43, 112
    %v103 = vpop.permute.xlu0 %102
    %vm104 = vcmp.lt.s32.totalorder %v42, 112
    %v105 = vsel %vm104, %v101, %v103
    %v106 = vsel %vm104, %v103, %v101
    %v107 = vsub.s32 %v105, %v42
    %v108 = vsub.s32 %v106, %v43
    %v110 = vlaneseq
    %v111 = vshrl.u32 %v110, 7
    %v112 = vsub.s32 0, %v111
    %v113 = vrot.slane %v99, %v112
    %v114 = vlaneseq
    %v115 = vshrl.u32 %v114, 7
    %v116 = vsub.s32 1, %v115
    %v117 = vrot.slane %v99, %v116
    %120 = vrot.lane.b32.xlu0 %v113, 112
    %v121 = vpop.permute.xlu0 %120
    %122 = vrot.lane.b32.xlu0 %v117, 112
    %v123 = vpop.permute.xlu0 %122
    %v124 = vsel %vm104, %v121, %v123
    %v125 = vsel %vm104, %v123, %v121
    %vm126 = vcmp.eq.s32.totalorder %v107, 16
    %vm127 = vcmp.eq.s32.totalorder %v108, 16
    %vm128 = vcmp.eq.s32.totalorder %v107, 4294967280
    %vm129 = vcmp.eq.s32.totalorder %v108, 4294967280
    %v130 = vsel %vm128, %v124, 0.0
    %v131 = vsel %vm129, %v125, 0.0
    %v132 = vsel %vm126, %v113, %v130
    %v133 = vsel %vm127, %v117, %v131
    %134 = vrot.lane.b32.xlu0 %v39, 112
    %v135 = vpop.permute.xlu0 %134
    %136 = vrot.lane.b32.xlu0 %v40, 112
    %v137 = vpop.permute.xlu0 %136
    %v138 = vsel %vm104, %v135, %v137
    %v139 = vsel %vm104, %v137, %v135
    %v140 = vsub.f32 %v39, %v138
    %v141 = vsub.f32 %v40, %v139
    %v142 = vand.u32 2147483647, %v140
    %v143 = vand.u32 2147483647, %v141
    %v144 = vlaneseq
    %v145 = vshrl.u32 %v144, 7
    %v146 = vsub.s32 0, %v145
    %v147 = vrot.slane %v132, %v146
    %v148 = vlaneseq
    %v149 = vshrl.u32 %v148, 7
    %v150 = vsub.s32 0, %v149
    %v151 = vrot.slane %v133, %v150
    %v152 = vmul.f32 %v142, %v147
    %v153 = vmul.f32 %v143, %v151
    %v154 = vadd.f32 %v97, %v152
    %v155 = vadd.f32 %v98, %v153
    %v156 = vadd.f32 %v154, %v155
    %157 = vst [vmem:[#allocation7] sm:$0xff] %v156
    // Predicated region
    $region22: #{tpu_custom_call.1} parent=1 // pred_check
      _
    $region23: #{tpu_custom_call.1} parent=1 // pred_check_branch
      %159 = sbr.rel (0) target = $region25
    $region24: #{tpu_custom_call.1} parent=1 // pred_region
      %s161 = ssub.s32 128, 128
      %162 = vsyncadd [#allocation4], %s161
      %s164 = sshll.u32 [#allocation7], 4
      %s165 = int_to_ptr.vmem [resolvable:$true] %s164
      %167 = dma.vmem_to_hbm [thread:$0]  %s165, 128, %s3, [#allocation4]
    $region25: #{tpu_custom_call.1} parent=1 // pred_fallthru
      _
    // Predicated region
    $region26: #{tpu_custom_call.1} parent=1 // pred_check
      _
    $region27: #{tpu_custom_call.1} parent=1 // pred_check_branch
      %169 = sbr.rel (0) target = $region29
    $region28: #{tpu_custom_call.1} parent=1 // pred_region
      %170 = dma.done [#allocation4], 128
    $region29: #{tpu_custom_call.1} parent=1 // pred_fallthru
      _
    %171 = vsyncpa [#allocation3], 1
    %172 = vsyncpa [#allocation6], 1
    %173 = vsyncpa [#allocation4], 1

</llo_original>
